<compile_context>
chip_gen: v7x
topology: tpu7x:2x2x1
jax: 0.10.0
libtpu: 0.0.40
codegen_flags: <defaults>
</compile_context>

<pallas_src>
import functools
import math

import jax
import jax.numpy as jnp
from jax.experimental import pallas as pl
from jax.experimental.pallas import tpu as pltpu


def _choose_tile(dim, preferred, align):
    """Largest tile <= preferred, multiple of `align`, dividing `dim` (else full dim)."""
    if dim <= preferred:
        return dim
    t = (preferred // align) * align
    while t >= align:
        if dim % t == 0:
            return t
        t -= align
    return dim


def _choose_head_block(n_heads, max_heads):
    """Largest head-block size <= max_heads that divides n_heads."""
    best = 1
    for sb in range(1, max_heads + 1):
        if n_heads % sb == 0:
            best = sb
    return best


def _equal_linear_heads_kernel(*refs, weight_gain, activation,
                               has_pre, has_post, heads_per_step):
    it = iter(refs)
    x_ref = next(it)                               # (sb, tm, K)   stream dtype
    w_ref = next(it)                               # (sb, K, tn)   stream dtype (pre-transposed)
    pre_ref = next(it) if has_pre else None        # (sb, 1, tn)   f32, added before activation
    post_ref = next(it) if has_post else None      # (1, 1, tn)    f32, added after activation
    o_ref = next(it)                               # (sb, tm, tn)

    # Static unroll over the heads in this block: one MXU matmul + small f32
    # epilogue each. No K loop, no scratch accumulator.
    for h in range(heads_per_step):
        acc = jnp.dot(x_ref[h], w_ref[h], preferred_element_type=jnp.float32)
        # Equalized-LR gain commutes through the matmul: scale the small
        # [tm, tn] result instead of the [K, N] weight tile.
        acc = acc * jnp.float32(weight_gain)
        if has_pre:
            acc = acc + pre_ref[h]                 # (1, tn) broadcast over rows
        if activation == "lrelu":
            # bias_act 'lrelu': leaky_relu(slope=0.2) followed by gain sqrt(2).
            acc = jnp.where(acc >= 0, acc, 0.2 * acc) * jnp.float32(math.sqrt(2.0))
        if has_post:
            acc = acc + post_ref[0]                # w_avg AFTER activation
        o_ref[h] = acc.astype(o_ref.dtype)


def equal_linear_heads(x, weight, bias=None, w_avg=None, *,
                       lr_multiplier=1.0, activation="linear",
                       tm=128, tn=512, max_heads_per_step=3,
                       stream_dtype=jnp.bfloat16, out_dtype=None):
    """Batched per-style-head EqualLinear with fused w_avg residual add.

    x:      [S, M, K]   (S = n_styles heads, M = batch, K = in_features)
    weight: [S, N, K]   (PyTorch [out_features, in_features] per head)
    bias:   [S, N] or None
    w_avg:  [N] or None (Psp256Encoder latent-average residual)
    returns [S, M, N]
    """
    S, M, K = x.shape
    S2, N, K2 = weight.shape
    assert S == S2 and K == K2, "shape mismatch between x and weight"
    if bias is not None:
        assert bias.shape == (S, N)
    if w_avg is not None:
        assert w_avg.shape[-1] == N

    out_dtype = out_dtype or x.dtype
    weight_gain = lr_multiplier / math.sqrt(K)

    tm = _choose_tile(M, tm, 8)
    tn = _choose_tile(N, tn, 128)          # full N at production shape (N=512)
    sb = _choose_head_block(S, max_heads_per_step)

    # Memory-bound kernel: stream the big operands narrow (bf16), keep f32
    # accumulate + epilogue inside the kernel.
    # TODO(synk): on v7x an fp8 weight path (per-head scale folded into
    #             weight_gain) would halve the dominant weight traffic again.
    x_s = x.astype(stream_dtype)
    # One-time layout plumbing: [S, N, K] -> [S, K, N] so the MXU contracts the
    # LHS last dim against the RHS second-to-last dim (no in-kernel transpose).
    w_kn = jnp.swapaxes(weight, -1, -2).astype(stream_dtype)

    # Pre-fold additive terms (f32). For the production 'linear' path the bias
    # (scaled by lr_multiplier) and w_avg collapse into a single per-head
    # additive stream; for 'lrelu' w_avg must be added AFTER the activation.
    pre = None
    post = None
    if bias is not None:
        pre = bias.astype(jnp.float32) * jnp.float32(lr_multiplier)       # (S, N)
    if w_avg is not None:
        wv = jnp.reshape(w_avg.astype(jnp.float32), (N,))
        if activation == "linear":
            pre = (pre + wv[None, :]) if pre is not None \
                else jnp.broadcast_to(wv[None, :], (S, N))
        else:
            post = wv.reshape(1, 1, N)
    has_pre = pre is not None
    has_post = post is not None
    if has_pre:
        pre = pre.reshape(S, 1, N)

    # Grid: (head-blocks, N-tiles, M-tiles). M innermost -> the (s, j)-indexed
    # weight tile is constant across consecutive steps, so Pallas skips its
    # re-DMA for large batches. No reduction axis -> all parallel.
    grid = (S // sb, N // tn, M // tm)

    in_specs = [
        pl.BlockSpec((sb, tm, K), lambda s, j, i: (s, i, 0)),    # x
        pl.BlockSpec((sb, K, tn), lambda s, j, i: (s, 0, j)),    # weight [K, N]
    ]
    args = [x_s, w_kn]
    if has_pre:
        in_specs.append(pl.BlockSpec((sb, 1, tn), lambda s, j, i: (s, 0, j)))
        args.append(pre)
    if has_post:
        in_specs.append(pl.BlockSpec((1, 1, tn), lambda s, j, i: (0, 0, j)))
        args.append(post)

    kernel = functools.partial(
        _equal_linear_heads_kernel,
        weight_gain=float(weight_gain),
        activation=activation,
        has_pre=has_pre,
        has_post=has_post,
        heads_per_step=sb,
    )

    stream_bytes = jnp.dtype(stream_dtype).itemsize
    out_bytes = jnp.dtype(out_dtype).itemsize
    cost = pl.CostEstimate(
        flops=2 * S * M * N * K,
        transcendentals=0,
        bytes_accessed=(stream_bytes * (S * M * K + S * K * N)
                        + out_bytes * S * M * N
                        + (4 * S * N if has_pre else 0)
                        + (4 * N if has_post else 0)),
    )

    return pl.pallas_call(
        kernel,
        out_shape=jax.ShapeDtypeStruct((S, M, N), out_dtype),
        grid_spec=pltpu.PrefetchScalarGridSpec(
            num_scalar_prefetch=0,
            grid=grid,
            in_specs=in_specs,
            out_specs=pl.BlockSpec((sb, tm, tn), lambda s, j, i: (s, i, j)),
        ),
        compiler_params=pltpu.CompilerParams(
            # Heads / N / M are all independent -> shard across TCs on v7x;
            # neutral on single-TC v5e/v6e.
            dimension_semantics=("parallel", "parallel", "parallel"),
            # Honest limit: per-step footprint (double-buffered) is < 6 MB even
            # at production tiles; leave VMEM headroom for surrounding fusions.
            vmem_limit_bytes=16 * 1024 * 1024,
        ),
        cost_estimate=cost,
    )(*args)


def equal_linear(x, weight, bias=None, *, lr_multiplier=1.0, activation="linear"):
    """Single EqualLinear layer (convenience wrapper over the batched kernel)."""
    out = equal_linear_heads(
        x[None], weight[None],
        None if bias is None else bias[None],
        None,
        lr_multiplier=lr_multiplier,
        activation=activation,
    )
    return out[0]


if __name__ == "__main__":
    # Small shapes consistent with the Psp256Encoder style heads
    # (production: n_styles=18, features=512; here scaled down but lane-dense).
    n_styles, batch, features = 4, 8, 256
    lr_multiplier = 1.0
    bias_init = 0.0        # EqualLinear default in GradualStyleBlock

    key = jax.random.PRNGKey(0)
    kx, kw, ka = jax.random.split(key, 3)

    # x_heads[s] stands in for the flattened GradualStyleBlock-s conv output.
    x_heads = jax.random.normal(kx, (n_styles, batch, features), dtype=jnp.float32)
    # __init__: weight = randn([out, in]) / lr_multiplier ; bias = full([out], bias_init)
    weights = jax.random.normal(
        kw, (n_styles, features, features), dtype=jnp.float32) / lr_multiplier
    biases = jnp.full((n_styles, features), jnp.float32(bias_init))
    w_avg = jax.random.normal(ka, (features,), dtype=jnp.float32)

    out = equal_linear_heads(x_heads, weights, biases, w_avg,
                             lr_multiplier=lr_multiplier, activation="linear")
    out = jax.block_until_ready(out)

    # Psp256Encoder output layout: stack along dim=1 -> [batch, n_styles, features]
    latents = jnp.transpose(out, (1, 0, 2))
    assert latents.shape == (batch, n_styles, features)

    weight_gain = lr_multiplier / math.sqrt(features)

    # Reference 1: same streaming precision as the kernel (bf16 operands,
    # f32 accumulate) -> tight tolerance.
    x_b = x_heads.astype(jnp.bfloat16).astype(jnp.float32)
    w_b = weights.astype(jnp.bfloat16).astype(jnp.float32)
    ref_bf16 = (jnp.einsum("smk,snk->smn", x_b, w_b,
                           precision=jax.lax.Precision.HIGHEST) * weight_gain
                + (biases * lr_multiplier)[:, None, :]
                + w_avg[None, None, :])
    assert jnp.allclose(out, ref_bf16, atol=2e-3, rtol=2e-3), \
        "mismatch vs bf16-matched reference"

    # Reference 2: full-f32 module semantics (PyTorch addmm path + w_avg add);
    # loose tolerance covers the deliberate bf16 operand streaming.
    ref_f32 = (jnp.einsum("smk,snk->smn", x_heads, weights * weight_gain,
                          precision=jax.lax.Precision.HIGHEST)
               + (biases * lr_multiplier)[:, None, :]
               + w_avg[None, None, :])
    assert jnp.allclose(out, ref_f32, atol=5e-2, rtol=5e-2), \
        "mismatch vs f32 reference"

    print("KERNEL_OK")
</pallas_src>

<mosaic_0001>
module attributes {stable_mosaic.version = 11 : i64} {
  func.func @_equal_linear_heads_kernel(%arg0: i32, %arg1: i32, %arg2: i32, %arg3: memref<2x8x256xbf16, #tpu.memory_space<vmem>>, %arg4: memref<2x256x256xbf16, #tpu.memory_space<vmem>>, %arg5: memref<2x1x256xf32, #tpu.memory_space<vmem>>, %arg6: memref<2x8x256xf32, #tpu.memory_space<vmem>>) attributes {dimension_semantics = [#tpu.dimension_semantics<parallel>, #tpu.dimension_semantics<parallel>, #tpu.dimension_semantics<parallel>], iteration_bounds = array<i64: 2, 1, 1>, scalar_prefetch = 0 : i64, scratch_operands = 0 : i64, tpu.core_type = #tpu.core_type<tc>, window_params = [{transform_indices = @transform_0, window_bounds = array<i64: 2, 8, 256>}, {transform_indices = @transform_1, window_bounds = array<i64: 2, 256, 256>}, {transform_indices = @transform_2, window_bounds = array<i64: 2, 1, 256>}, {transform_indices = @transform_3, window_bounds = array<i64: 2, 8, 256>}]} {
    %c0 = arith.constant 0 : index
    %c0_0 = arith.constant 0 : index
    %c0_1 = arith.constant 0 : index
    %0 = vector.load %arg3[%c0, %c0_0, %c0_1] : memref<2x8x256xbf16, #tpu.memory_space<vmem>>, vector<1x8x256xbf16>
    %1 = vector.shape_cast %0 : vector<1x8x256xbf16> to vector<8x256xbf16>
    %c0_2 = arith.constant 0 : index
    %c0_3 = arith.constant 0 : index
    %c0_4 = arith.constant 0 : index
    %2 = vector.load %arg4[%c0_2, %c0_3, %c0_4] : memref<2x256x256xbf16, #tpu.memory_space<vmem>>, vector<1x256x256xbf16>
    %3 = vector.shape_cast %2 : vector<1x256x256xbf16> to vector<256x256xbf16>
    %cst = arith.constant dense<0.000000e+00> : vector<8x256xf32>
    %4 = tpu.matmul %1, %3, %cst {dimension_numbers = #tpu.dot_dimension_numbers<[1], [0], [0], [1], [0, 0, 1, 1], [], []>} : vector<8x256xbf16>, vector<256x256xbf16>, vector<8x256xf32> -> vector<8x256xf32>
    %cst_5 = arith.constant 6.250000e-02 : f32
    %5 = vector.broadcast %cst_5 : f32 to vector<8x256xf32>
    %6 = arith.mulf %4, %5 : vector<8x256xf32>
    %c0_6 = arith.constant 0 : index
    %c0_7 = arith.constant 0 : index
    %c0_8 = arith.constant 0 : index
    %7 = vector.load %arg5[%c0_6, %c0_7, %c0_8] : memref<2x1x256xf32, #tpu.memory_space<vmem>>, vector<1x1x256xf32>
    %8 = vector.shape_cast %7 : vector<1x1x256xf32> to vector<1x256xf32>
    %9 = vector.broadcast %8 : vector<1x256xf32> to vector<8x256xf32>
    %10 = arith.addf %6, %9 : vector<8x256xf32>
    %c0_9 = arith.constant 0 : index
    %c0_10 = arith.constant 0 : index
    %c0_11 = arith.constant 0 : index
    %11 = vector.load %arg6[%c0_9, %c0_10, %c0_11] : memref<2x8x256xf32, #tpu.memory_space<vmem>>, vector<1x8x256xf32>
    %12 = vector.shape_cast %11 : vector<1x8x256xf32> to vector<8x256xf32>
    %13 = vector.shape_cast %10 : vector<8x256xf32> to vector<1x8x256xf32>
    tpu.vector_store %arg6[%c0_9, %c0_10, %c0_11], %13 {strides = array<i32>} : memref<2x8x256xf32, #tpu.memory_space<vmem>>, vector<1x8x256xf32>,
    %c1 = arith.constant 1 : index
    %c0_12 = arith.constant 0 : index
    %c0_13 = arith.constant 0 : index
    %14 = vector.load %arg3[%c1, %c0_12, %c0_13] : memref<2x8x256xbf16, #tpu.memory_space<vmem>>, vector<1x8x256xbf16>
    %15 = vector.shape_cast %14 : vector<1x8x256xbf16> to vector<8x256xbf16>
    %c1_14 = arith.constant 1 : index
    %c0_15 = arith.constant 0 : index
    %c0_16 = arith.constant 0 : index
    %16 = vector.load %arg4[%c1_14, %c0_15, %c0_16] : memref<2x256x256xbf16, #tpu.memory_space<vmem>>, vector<1x256x256xbf16>
    %17 = vector.shape_cast %16 : vector<1x256x256xbf16> to vector<256x256xbf16>
    %cst_17 = arith.constant dense<0.000000e+00> : vector<8x256xf32>
    %18 = tpu.matmul %15, %17, %cst_17 {dimension_numbers = #tpu.dot_dimension_numbers<[1], [0], [0], [1], [0, 0, 1, 1], [], []>} : vector<8x256xbf16>, vector<256x256xbf16>, vector<8x256xf32> -> vector<8x256xf32>
    %cst_18 = arith.constant 6.250000e-02 : f32
    %19 = vector.broadcast %cst_18 : f32 to vector<8x256xf32>
    %20 = arith.mulf %18, %19 : vector<8x256xf32>
    %c1_19 = arith.constant 1 : index
    %c0_20 = arith.constant 0 : index
    %c0_21 = arith.constant 0 : index
    %21 = vector.load %arg5[%c1_19, %c0_20, %c0_21] : memref<2x1x256xf32, #tpu.memory_space<vmem>>, vector<1x1x256xf32>
    %22 = vector.shape_cast %21 : vector<1x1x256xf32> to vector<1x256xf32>
    %23 = vector.broadcast %22 : vector<1x256xf32> to vector<8x256xf32>
    %24 = arith.addf %20, %23 : vector<8x256xf32>
    %c1_22 = arith.constant 1 : index
    %c0_23 = arith.constant 0 : index
    %c0_24 = arith.constant 0 : index
    %25 = vector.load %arg6[%c1_22, %c0_23, %c0_24] : memref<2x8x256xf32, #tpu.memory_space<vmem>>, vector<1x8x256xf32>
    %26 = vector.shape_cast %25 : vector<1x8x256xf32> to vector<8x256xf32>
    %27 = vector.shape_cast %24 : vector<8x256xf32> to vector<1x8x256xf32>
    tpu.vector_store %arg6[%c1_22, %c0_23, %c0_24], %27 {strides = array<i32>} : memref<2x8x256xf32, #tpu.memory_space<vmem>>, vector<1x8x256xf32>,
    return
  }
  func.func @transform_0(%arg0: i32, %arg1: i32, %arg2: i32) -> (i32, i32, i32) {
    %c0_i32 = arith.constant 0 : i32
    %c0_i32_0 = arith.constant 0 : i32
    return %arg0, %arg2, %c0_i32 : i32, i32, i32
  }
  func.func @transform_1(%arg0: i32, %arg1: i32, %arg2: i32) -> (i32, i32, i32) {
    %c0_i32 = arith.constant 0 : i32
    %c0_i32_0 = arith.constant 0 : i32
    return %arg0, %c0_i32, %arg1 : i32, i32, i32
  }
  func.func @transform_2(%arg0: i32, %arg1: i32, %arg2: i32) -> (i32, i32, i32) {
    %c0_i32 = arith.constant 0 : i32
    %c0_i32_0 = arith.constant 0 : i32
    return %arg0, %c0_i32, %arg1 : i32, i32, i32
  }
  func.func @transform_3(%arg0: i32, %arg1: i32, %arg2: i32) -> (i32, i32, i32) {
    %c0_i32 = arith.constant 0 : i32
    return %arg0, %arg2, %arg1 : i32, i32, i32
  }
}

</mosaic_0001>

<llo_original>
// kernel: tpu_custom_call.1
$region0: #{tpu_custom_call.1}
  #allocation0 [shape = 'u32[]', space=smem, size = 0x4, offset = 0x4, fixed_abs, tag = 'smem constant byte address 0x4 - core index']
  #allocation1 [shape = 'u32[144,128]{1,0:T(1,128)}', space=vmem, size = 0x12000, scoped, tag = 'internal scratch']
  %s0 = inlined_call_operand.hbm [shape: bf16[4,8,256], index: 0, kind: input, shape index: {}]
  %s1 = inlined_call_operand.hbm [shape: bf16[4,256,256], index: 1, kind: input, shape index: {}]
  %s2 = inlined_call_operand.hbm [shape: f32[4,1,256], index: 2, kind: input, shape index: {}]
  %s3 = inlined_call_operand.hbm [shape: f32[4,8,256], index: 3, kind: output, shape index: {}]
  %s4 = sld [smem:[#allocation0]]
  $region57: #{tpu_custom_call.1} parent=0
    _
  %s6 = ssub.s32 1, %s4
  %s7 = scalar_select 0, %s6, %s4
  $region1: #{tpu_custom_call.1} parent=0
    #allocation2 [shape = 'u8[16384]{0}', space=vmem, size = 0x4000, scoped, tag = 'input window, operand 0']
    #allocation3 [shape = 's32[2]{0}', space=sflag, size = 0x8, scoped, tag = 'scoped memory for tpu_custom_call.1']
    #allocation4 [shape = 's32[2]{0}', space=sflag, size = 0x8, scoped, tag = 'scoped memory for tpu_custom_call.1']
    #allocation5 [shape = 'u8[524288]{0}', space=vmem, size = 0x80000, scoped, tag = 'input window, operand 1']
    #allocation6 [shape = 's32[2]{0}', space=sflag, size = 0x8, scoped, tag = 'scoped memory for tpu_custom_call.1']
    #allocation7 [shape = 'u8[4096]{0}', space=vmem, size = 0x1000, scoped, tag = 'input window, operand 2']
    #allocation8 [shape = 'u8[32768]{0}', space=vmem, size = 0x8000, scoped, tag = 'output window, operand 0']
    %8 = vsyncpa [#allocation3], 0
    %s9 = scalar_lea.sflag [#allocation3], 1
    %10 = vsyncpa %s9, 0
    %11 = vsyncpa [#allocation6], 0
    %s12 = scalar_lea.sflag [#allocation6], 1
    %13 = vsyncpa %s12, 0
    %14 = vsyncpa [#allocation4], 0
    %s15 = scalar_lea.sflag [#allocation4], 1
    %16 = vsyncpa %s15, 0
    loop: start=0, step=1, limit=4
    $region2: #{tpu_custom_call.1} parent=1 // loop_pre_header
      _
    $region3: #{tpu_custom_call.1} parent=1 // loop_header
      %s18 = sphi 0, %s22
      %p19 = scmp.ge.s32.totalorder %s18, 4
      %s25 = sphi 0, %s44
      %s26 = sphi 0, %s40
      %s27 = sphi 0, %s36
      %s28 = sphi 0, %s25
      %s29 = sphi 0, %s26
      %s30 = sphi 0, %s27
      %s31 = sphi 0, %s28
      %s32 = sphi 0, %s29
      %s33 = sphi 0, %s30
      %s49 = sphi 0, %s51
      %s52 = sphi 0, %s49
      %s53 = sphi 0, %s52
      %s69 = sphi 0, %s53
      %s77 = sphi 0, %s79
      %s80 = sphi 0, %s77
      %s81 = sphi 0, %s80
      %s97 = sphi 0, %s81
      %s105 = sphi 0, %s107
      %s108 = sphi 0, %s105
      %s109 = sphi 0, %s108
      %s125 = sphi 0, %s109
      %s135 = sphi 0, %s137
      %s138 = sphi 0, %s135
      %s139 = sphi 0, %s138
      %s155 = sphi 0, %s139
    $region4: #{tpu_custom_call.1} parent=1 // loop_header_branch
      %21 = sbr.rel (%p19) target = $region8
    $region5: #{tpu_custom_call.1} parent=1 // loop_body
      %s23 = ssub.s32 %s18, 1
      %s24 = ssub.s32 %s18, 2
      %s34 = sadd.s32 1, %s27
      %p35 = scmp.ge.s32.totalorder %s34, 1
      %s36 = scalar_select %p35, 0, %s34
      %s37 = sadd.s32 1, %s26
      %s38 = scalar_select %p35, %s37, %s26
      %p39 = scmp.ge.s32.totalorder %s38, 1
      %s40 = scalar_select %p39, 0, %s38
      %s41 = sadd.s32 1, %s25
      %s42 = scalar_select %p39, %s41, %s25
      %p43 = scmp.ge.s32.totalorder %s42, 2
      %s44 = scalar_select %p43, 0, %s42
      %s45 = ssub.s32 %s25, %s44
      %s46 = ssub.s32 %s27, %s36
      %s47 = sor.u32 %s45, %s46
      %p48 = scmp.eq.s32.totalorder %s47, 0
      %s50 = sadd.s32 %s49, 1
      %s51 = scalar_select %p48, %s49, %s50
      %p54 = pneg %p48
      %p55 = scmp.eq.s32.totalorder %s18, 1
      %p56 = por %p54, %p55
      %p57 = scmp.ne.s32.totalorder %s49, %s52
      %p58 = scmp.eq.s32.totalorder %s18, 0
      %p59 = por %p57, %p58
      %p60 = scmp.ne.s32.totalorder %s49, %s52
      %p61 = scmp.eq.s32.totalorder %s23, 1
      %p62 = por %p60, %p61
      %p63 = scmp.ne.s32.totalorder %s52, %s53
      %p64 = scmp.eq.s32.totalorder %s23, 0
      %p65 = por %p63, %p64
      %p66 = scmp.ne.s32.totalorder %s52, %s53
      %p67 = scmp.eq.s32.totalorder %s24, 1
      %p68 = por %p66, %p67
      %p70 = scmp.ne.s32.totalorder %s53, %s69
      %p71 = scmp.eq.s32.totalorder %s24, 0
      %p72 = por %p70, %p71
      %s73 = ssub.s32 %s25, %s44
      %s74 = ssub.s32 %s26, %s40
      %s75 = sor.u32 %s73, %s74
      %p76 = scmp.eq.s32.totalorder %s75, 0
      %s78 = sadd.s32 %s77, 1
      %s79 = scalar_select %p76, %s77, %s78
      %p82 = pneg %p76
      %p83 = scmp.eq.s32.totalorder %s18, 1
      %p84 = por %p82, %p83
      %p85 = scmp.ne.s32.totalorder %s77, %s80
      %p86 = scmp.eq.s32.totalorder %s18, 0
      %p87 = por %p85, %p86
      %p88 = scmp.ne.s32.totalorder %s77, %s80
      %p89 = scmp.eq.s32.totalorder %s23, 1
      %p90 = por %p88, %p89
      %p91 = scmp.ne.s32.totalorder %s80, %s81
      %p92 = scmp.eq.s32.totalorder %s23, 0
      %p93 = por %p91, %p92
      %p94 = scmp.ne.s32.totalorder %s80, %s81
      %p95 = scmp.eq.s32.totalorder %s24, 1
      %p96 = por %p94, %p95
      %p98 = scmp.ne.s32.totalorder %s81, %s97
      %p99 = scmp.eq.s32.totalorder %s24, 0
      %p100 = por %p98, %p99
      %s101 = ssub.s32 %s25, %s44
      %s102 = ssub.s32 %s26, %s40
      %s103 = sor.u32 %s101, %s102
      %p104 = scmp.eq.s32.totalorder %s103, 0
      %s106 = sadd.s32 %s105, 1
      %s107 = scalar_select %p104, %s105, %s106
      %p110 = pneg %p104
      %p111 = scmp.eq.s32.totalorder %s18, 1
      %p112 = por %p110, %p111
      %p113 = scmp.ne.s32.totalorder %s105, %s108
      %p114 = scmp.eq.s32.totalorder %s18, 0
      %p115 = por %p113, %p114
      %p116 = scmp.ne.s32.totalorder %s105, %s108
      %p117 = scmp.eq.s32.totalorder %s23, 1
      %p118 = por %p116, %p117
      %p119 = scmp.ne.s32.totalorder %s108, %s109
      %p120 = scmp.eq.s32.totalorder %s23, 0
      %p121 = por %p119, %p120
      %p122 = scmp.ne.s32.totalorder %s108, %s109
      %p123 = scmp.eq.s32.totalorder %s24, 1
      %p124 = por %p122, %p123
      %p126 = scmp.ne.s32.totalorder %s109, %s125
      %p127 = scmp.eq.s32.totalorder %s24, 0
      %p128 = por %p126, %p127
      %s129 = ssub.s32 %s25, %s44
      %s130 = ssub.s32 %s27, %s36
      %s131 = sor.u32 %s129, %s130
      %s132 = ssub.s32 %s26, %s40
      %s133 = sor.u32 %s131, %s132
      %p134 = scmp.eq.s32.totalorder %s133, 0
      %s136 = sadd.s32 %s135, 1
      %s137 = scalar_select %p134, %s135, %s136
      %p140 = pneg %p134
      %p141 = scmp.eq.s32.totalorder %s18, 1
      %p142 = por %p140, %p141
      %p143 = scmp.ne.s32.totalorder %s135, %s138
      %p144 = scmp.eq.s32.totalorder %s18, 0
      %p145 = por %p143, %p144
      %p146 = scmp.ne.s32.totalorder %s135, %s138
      %p147 = scmp.eq.s32.totalorder %s23, 1
      %p148 = por %p146, %p147
      %p149 = scmp.ne.s32.totalorder %s138, %s139
      %p150 = scmp.eq.s32.totalorder %s23, 0
      %p151 = por %p149, %p150
      %p152 = scmp.ne.s32.totalorder %s138, %s139
      %p153 = scmp.eq.s32.totalorder %s24, 1
      %p154 = por %p152, %p153
      %p156 = scmp.ne.s32.totalorder %s139, %s155
      %p157 = scmp.eq.s32.totalorder %s24, 0
      %p158 = por %p156, %p157
      %p159 = scmp.le.s32.totalorder 1, %s18
      %p160 = scmp.lt.s32.totalorder %s18, 3
      %p161 = pnand %p159, %p160
      %p162 = pneg %p161
      // Predicated region
      $region9: #{tpu_custom_call.1} parent=5 // pred_check
        _
      $region10: #{tpu_custom_call.1} parent=5 // pred_check_branch
        %164 = sbr.rel (%p161) target = $region12
      $region11: #{tpu_custom_call.1} parent=5 // pred_region
        %s165 = ssub.s32 %s18, 1
      $region12: #{tpu_custom_call.1} parent=5 // pred_fallthru
        _
      %p166 = scmp.lt.s32.totalorder %s18, 2
      // Predicated region
      $region13: #{tpu_custom_call.1} parent=5 // pred_check
        %p167 = pneg %p166
      $region14: #{tpu_custom_call.1} parent=5 // pred_check_branch
        %169 = sbr.rel (%p167) target = $region16
      $region15: #{tpu_custom_call.1} parent=5 // pred_region
        // Predicated region
        $region17: #{tpu_custom_call.1} parent=15 // pred_check
          %p170 = pneg %p59
        $region18: #{tpu_custom_call.1} parent=15 // pred_check_branch
          %172 = sbr.rel (%p170) target = $region20
        $region19: #{tpu_custom_call.1} parent=15 // pred_region
          %s173 = sand.u32 %s49, 1
          %s174 = scalar_lea.sflag [#allocation3], %s173
          %s175 = sand.u32 %s49, 1
          %s176 = smul.addr %s175, 16
          %s177 = scalar_lea.vmem [#allocation2], %s176
          %s178 = smul.u32 2, %s25
          %s180 = ssub.s32 256, 256
          %181 = vsyncadd %s174, %s180
          %s182 = smul.addr %s27, 2
          %s183 = smul.addr %s178, 2
          %s184 = sadd.s32 %s182, %s183
          %s185 = smul.addr %s184, 64
          %s186 = scalar_lea.hbm %s0, %s185
          %s187 = sshll.u32 %s177, 4
          %s188 = int_to_ptr.vmem [resolvable:$true] %s187
          %193 = dma.hbm_to_vmem [thread:$0]  %s186, 256, %s188, %s174, 128, 128, 8
        $region20: #{tpu_custom_call.1} parent=15 // pred_fallthru
          _
        // Predicated region
        $region21: #{tpu_custom_call.1} parent=15 // pred_check
          %p194 = pneg %p87
        $region22: #{tpu_custom_call.1} parent=15 // pred_check_branch
          %196 = sbr.rel (%p194) target = $region24
        $region23: #{tpu_custom_call.1} parent=15 // pred_region
          %s197 = sand.u32 %s18, 1
          %s198 = scalar_lea.sflag [#allocation6], %s197
          %s199 = sand.u32 %s77, 1
          %s200 = smul.addr %s199, 512
          %s201 = scalar_lea.vmem [#allocation5], %s200
          %s202 = smul.u32 2, %s25
          %s203 = smul.u32 2, %s26
          %s205 = ssub.s32 8192, 8192
          %206 = vsyncadd %s198, %s205
          %s207 = smul.addr %s202, 64
          %s208 = sadd.s32 %s203, %s207
          %s209 = smul.addr %s208, 64
          %s210 = scalar_lea.hbm %s1, %s209
          %s211 = sshll.u32 %s201, 4
          %s212 = int_to_ptr.vmem [resolvable:$true] %s211
          %217 = dma.hbm_to_vmem [thread:$0]  %s210, 8192, %s212, %s198, 128, 128, 8
        $region24: #{tpu_custom_call.1} parent=15 // pred_fallthru
          _
        // Predicated region
        $region25: #{tpu_custom_call.1} parent=15 // pred_check
          %p218 = pneg %p115
        $region26: #{tpu_custom_call.1} parent=15 // pred_check_branch
          %220 = sbr.rel (%p218) target = $region28
        $region27: #{tpu_custom_call.1} parent=15 // pred_region
          %s221 = sand.u32 %s18, 1
          %s222 = scalar_lea.sflag [#allocation6], %s221
          %s223 = sand.u32 %s105, 1
          %s224 = smul.addr %s223, 4
          %s225 = scalar_lea.vmem [#allocation7], %s224
          %s226 = smul.u32 2, %s25
          %s227 = smul.u32 2, %s26
          %s229 = ssub.s32 64, 64
          %230 = vsyncadd %s222, %s229
          %s231 = smul.addr %s226, 2
          %s232 = sadd.s32 %s227, %s231
          %s233 = smul.addr %s232, 16
          %s234 = scalar_lea.hbm %s2, %s233
          %s235 = sshll.u32 %s225, 4
          %s236 = int_to_ptr.vmem [resolvable:$true] %s235
          %241 = dma.hbm_to_vmem [thread:$0]  %s234, 64, %s236, %s222, 32, 32, 2
        $region28: #{tpu_custom_call.1} parent=15 // pred_fallthru
          _
      $region16: #{tpu_custom_call.1} parent=5 // pred_fallthru
        _
      %p242 = scmp.le.s32.totalorder 1, %s18
      %p243 = scmp.lt.s32.totalorder %s18, 3
      %p244 = pnand %p242, %p243
      %p245 = pneg %p244
      // Predicated region
      $region29: #{tpu_custom_call.1} parent=5 // pred_check
        _
      $region30: #{tpu_custom_call.1} parent=5 // pred_check_branch
        %247 = sbr.rel (%p244) target = $region32
      $region31: #{tpu_custom_call.1} parent=5 // pred_region
        %s248 = ssub.s32 %s18, 1
        %s249 = sand.u32 %s52, 1
        %s250 = scalar_lea.sflag [#allocation3], %s249
        %s251 = sand.u32 %s52, 1
        %s252 = smul.addr %s251, 16
        %s253 = scalar_lea.vmem [#allocation2], %s252
        // Predicated region
        $region33: #{tpu_custom_call.1} parent=31 // pred_check
          %p254 = pneg %p65
        $region34: #{tpu_custom_call.1} parent=31 // pred_check_branch
          %256 = sbr.rel (%p254) target = $region36
        $region35: #{tpu_custom_call.1} parent=31 // pred_region
          %257 = dma.done %s250, 256
        $region36: #{tpu_custom_call.1} parent=31 // pred_fallthru
          _
        %s258 = sand.u32 %s23, 1
        %s259 = scalar_lea.sflag [#allocation6], %s258
        %s260 = sand.u32 %s80, 1
        %s261 = smul.addr %s260, 512
        %s262 = scalar_lea.vmem [#allocation5], %s261
        // Predicated region
        $region37: #{tpu_custom_call.1} parent=31 // pred_check
          %p263 = pneg %p93
        $region38: #{tpu_custom_call.1} parent=31 // pred_check_branch
          %265 = sbr.rel (%p263) target = $region40
        $region39: #{tpu_custom_call.1} parent=31 // pred_region
          %266 = dma.done %s259, 8192
        $region40: #{tpu_custom_call.1} parent=31 // pred_fallthru
          _
        %s267 = sand.u32 %s23, 1
        %s268 = scalar_lea.sflag [#allocation6], %s267
        %s269 = sand.u32 %s108, 1
        %s270 = smul.addr %s269, 4
        %s271 = scalar_lea.vmem [#allocation7], %s270
        // Predicated region
        $region41: #{tpu_custom_call.1} parent=31 // pred_check
          %p272 = pneg %p121
        $region42: #{tpu_custom_call.1} parent=31 // pred_check_branch
          %274 = sbr.rel (%p272) target = $region44
        $region43: #{tpu_custom_call.1} parent=31 // pred_region
          %275 = dma.done %s268, 64
        $region44: #{tpu_custom_call.1} parent=31 // pred_fallthru
          _
        %s276 = sand.u32 %s52, 1
        %s277 = scalar_lea.sflag [#allocation3], %s276
        %s278 = sand.u32 %s52, 1
        %s279 = smul.addr %s278, 16
        %s280 = scalar_lea.vmem [#allocation2], %s279
        %p281 = pneg %p65
        %p282 = pneg %p62
        %s283 = sand.u32 %s23, 1
        %s284 = scalar_lea.sflag [#allocation6], %s283
        %s285 = sand.u32 %s80, 1
        %s286 = smul.addr %s285, 512
        %s287 = scalar_lea.vmem [#allocation5], %s286
        %p288 = pneg %p93
        %p289 = pneg %p90
        %s290 = sand.u32 %s23, 1
        %s291 = scalar_lea.sflag [#allocation6], %s290
        %s292 = sand.u32 %s108, 1
        %s293 = smul.addr %s292, 4
        %s294 = scalar_lea.vmem [#allocation7], %s293
        %p295 = pneg %p121
        %p296 = pneg %p118
        %p297 = pneg %p151
        %p298 = pneg %p148
        %s299 = sand.u32 %s138, 1
        %s300 = scalar_lea.sflag [#allocation4], %s299
        %s301 = sand.u32 %s138, 1
        %s302 = smul.addr %s301, 32
        %s303 = scalar_lea.vmem [#allocation8], %s302
        %s304 = smul.u32 2, %s28
        %s305 = smul.u32 2, %s28
        %s306 = smul.u32 2, %s29
        %s307 = smul.u32 2, %s28
        %s308 = smul.u32 2, %s29
        %s309 = smul.u32 2, %s28
        %s310 = smul.u32 2, %s29
        %v311 = vld [vmem:[%s253] sm:$0xff]
        %v312 = vld [vmem:[%s262] sm:$0xff]
        %v313 = vld [vmem:[%s262 + $0x8] sm:$0xff]
        %v314 = vld [vmem:[%s262 + $0x10] sm:$0xff]
        %v315 = vld [vmem:[%s262 + $0x18] sm:$0xff]
        %v316 = vld [vmem:[%s262 + $0x20] sm:$0xff]
        %v317 = vld [vmem:[%s262 + $0x28] sm:$0xff]
        %v318 = vld [vmem:[%s262 + $0x30] sm:$0xff]
        %v319 = vld [vmem:[%s262 + $0x38] sm:$0xff]
        %v320 = vld [vmem:[%s262 + $0x40] sm:$0xff]
        %v321 = vld [vmem:[%s262 + $0x48] sm:$0xff]
        %v322 = vld [vmem:[%s262 + $0x50] sm:$0xff]
        %v323 = vld [vmem:[%s262 + $0x58] sm:$0xff]
        %v324 = vld [vmem:[%s262 + $0x60] sm:$0xff]
        %v325 = vld [vmem:[%s262 + $0x68] sm:$0xff]
        %v326 = vld [vmem:[%s262 + $0x70] sm:$0xff]
        %v327 = vld [vmem:[%s262 + $0x78] sm:$0xff]
        %v328 = vld [vmem:[%s262 + $0x80] sm:$0xff]
        %v329 = vld [vmem:[%s262 + $0x88] sm:$0xff]
        %v330 = vld [vmem:[%s262 + $0x90] sm:$0xff]
        %v331 = vld [vmem:[%s262 + $0x98] sm:$0xff]
        %v332 = vld [vmem:[%s262 + $0xa0] sm:$0xff]
        %v333 = vld [vmem:[%s262 + $0xa8] sm:$0xff]
        %v334 = vld [vmem:[%s262 + $0xb0] sm:$0xff]
        %v335 = vld [vmem:[%s262 + $0xb8] sm:$0xff]
        %v336 = vld [vmem:[%s262 + $0xc0] sm:$0xff]
        %v337 = vld [vmem:[%s262 + $0xc8] sm:$0xff]
        %v338 = vld [vmem:[%s262 + $0xd0] sm:$0xff]
        %v339 = vld [vmem:[%s262 + $0xd8] sm:$0xff]
        %v340 = vld [vmem:[%s262 + $0xe0] sm:$0xff]
        %v341 = vld [vmem:[%s262 + $0xe8] sm:$0xff]
        %v342 = vld [vmem:[%s262 + $0xf0] sm:$0xff]
        %v343 = vld [vmem:[%s262 + $0xf8] sm:$0xff]
        %v345 = vunpack.c.l.b16 %v311
        %v346 = vunpack.c.h.b16 %v311
        %v347 = vpack.c.b16 %v345, %v345
        %v348 = vpack.c.b16 %v346, %v346
        %v383 = vunpack.c.l.b16 %v312
        %v384 = vunpack.c.h.b16 %v312
        %v385 = vunpack.c.l.b16 %v313
        %v386 = vunpack.c.h.b16 %v313
        %v387 = vunpack.c.l.b16 %v314
        %v388 = vunpack.c.h.b16 %v314
        %v389 = vunpack.c.l.b16 %v315
        %v390 = vunpack.c.h.b16 %v315
        %v391 = vunpack.c.l.b16 %v316
        %v392 = vunpack.c.h.b16 %v316
        %v393 = vunpack.c.l.b16 %v317
        %v394 = vunpack.c.h.b16 %v317
        %v395 = vunpack.c.l.b16 %v318
        %v396 = vunpack.c.h.b16 %v318
        %v397 = vunpack.c.l.b16 %v319
        %v398 = vunpack.c.h.b16 %v319
        %v399 = vunpack.c.l.b16 %v320
        %v400 = vunpack.c.h.b16 %v320
        %v401 = vunpack.c.l.b16 %v321
        %v402 = vunpack.c.h.b16 %v321
        %v403 = vunpack.c.l.b16 %v322
        %v404 = vunpack.c.h.b16 %v322
        %v405 = vunpack.c.l.b16 %v323
        %v406 = vunpack.c.h.b16 %v323
        %v407 = vunpack.c.l.b16 %v324
        %v408 = vunpack.c.h.b16 %v324
        %v409 = vunpack.c.l.b16 %v325
        %v410 = vunpack.c.h.b16 %v325
        %v411 = vunpack.c.l.b16 %v326
        %v412 = vunpack.c.h.b16 %v326
        %v413 = vunpack.c.l.b16 %v327
        %v414 = vunpack.c.h.b16 %v327
        %v415 = vunpack.c.l.b16 %v328
        %v416 = vunpack.c.h.b16 %v328
        %v417 = vunpack.c.l.b16 %v329
        %v418 = vunpack.c.h.b16 %v329
        %v419 = vunpack.c.l.b16 %v330
        %v420 = vunpack.c.h.b16 %v330
        %v421 = vunpack.c.l.b16 %v331
        %v422 = vunpack.c.h.b16 %v331
        %v423 = vunpack.c.l.b16 %v332
        %v424 = vunpack.c.h.b16 %v332
        %v425 = vunpack.c.l.b16 %v333
        %v426 = vunpack.c.h.b16 %v333
        %v427 = vunpack.c.l.b16 %v334
        %v428 = vunpack.c.h.b16 %v334
        %v429 = vunpack.c.l.b16 %v335
        %v430 = vunpack.c.h.b16 %v335
        %v431 = vunpack.c.l.b16 %v336
        %v432 = vunpack.c.h.b16 %v336
        %v433 = vunpack.c.l.b16 %v337
        %v434 = vunpack.c.h.b16 %v337
        %v435 = vunpack.c.l.b16 %v338
        %v436 = vunpack.c.h.b16 %v338
        %v437 = vunpack.c.l.b16 %v339
        %v438 = vunpack.c.h.b16 %v339
        %v439 = vunpack.c.l.b16 %v340
        %v440 = vunpack.c.h.b16 %v340
        %v441 = vunpack.c.l.b16 %v341
        %v442 = vunpack.c.h.b16 %v341
        %v443 = vunpack.c.l.b16 %v342
        %v444 = vunpack.c.h.b16 %v342
        %v445 = vunpack.c.l.b16 %v343
        %v446 = vunpack.c.h.b16 %v343
        %v447 = vpack.c.b16 %v385, %v383
        %v448 = vpack.c.b16 %v386, %v384
        %v449 = vpack.c.b16 %v389, %v387
        %v450 = vpack.c.b16 %v390, %v388
        %v451 = vpack.c.b16 %v393, %v391
        %v452 = vpack.c.b16 %v394, %v392
        %v453 = vpack.c.b16 %v397, %v395
        %v454 = vpack.c.b16 %v398, %v396
        %v455 = vpack.c.b16 %v401, %v399
        %v456 = vpack.c.b16 %v402, %v400
        %v457 = vpack.c.b16 %v405, %v403
        %v458 = vpack.c.b16 %v406, %v404
        %v459 = vpack.c.b16 %v409, %v407
        %v460 = vpack.c.b16 %v410, %v408
        %v461 = vpack.c.b16 %v413, %v411
        %v462 = vpack.c.b16 %v414, %v412
        %v463 = vpack.c.b16 %v417, %v415
        %v464 = vpack.c.b16 %v418, %v416
        %v465 = vpack.c.b16 %v421, %v419
        %v466 = vpack.c.b16 %v422, %v420
        %v467 = vpack.c.b16 %v425, %v423
        %v468 = vpack.c.b16 %v426, %v424
        %v469 = vpack.c.b16 %v429, %v427
        %v470 = vpack.c.b16 %v430, %v428
        %v471 = vpack.c.b16 %v433, %v431
        %v472 = vpack.c.b16 %v434, %v432
        %v473 = vpack.c.b16 %v437, %v435
        %v474 = vpack.c.b16 %v438, %v436
        %v475 = vpack.c.b16 %v441, %v439
        %v476 = vpack.c.b16 %v442, %v440
        %v477 = vpack.c.b16 %v445, %v443
        %v478 = vpack.c.b16 %v446, %v444
        %511 = vmatprep.subr.bf16.mxu0 %v448
        %512 = vmatpush1.bf16.msra.mxu0 %v447
        %513 = vmatprep.subr.bf16.mxu0 %v450
        %514 = vmatpush1.bf16.msra.mxu0 %v449
        %515 = vmatprep.subr.bf16.mxu0 %v452
        %516 = vmatpush1.bf16.msra.mxu0 %v451
        %517 = vmatprep.subr.bf16.mxu0 %v454
        %518 = vmatpush1.bf16.msra.mxu0 %v453
        %519 = vmatprep.subr.bf16.mxu0 %v456
        %520 = vmatpush1.bf16.msra.mxu0 %v455
        %521 = vmatprep.subr.bf16.mxu0 %v458
        %522 = vmatpush1.bf16.msra.mxu0 %v457
        %523 = vmatprep.subr.bf16.mxu0 %v460
        %524 = vmatpush1.bf16.msra.mxu0 %v459
        %525 = vmatprep.subr.bf16.mxu0 %v462
        %526 = vmatpush1.bf16.msra.mxu0 %v461
        %527 = vmatprep.subr.bf16.mxu0 %v464
        %528 = vmatpush1.bf16.msra.mxu0 %v463
        %529 = vmatprep.subr.bf16.mxu0 %v466
        %530 = vmatpush1.bf16.msra.mxu0 %v465
        %531 = vmatprep.subr.bf16.mxu0 %v468
        %532 = vmatpush1.bf16.msra.mxu0 %v467
        %533 = vmatprep.subr.bf16.mxu0 %v470
        %534 = vmatpush1.bf16.msra.mxu0 %v469
        %535 = vmatprep.subr.bf16.mxu0 %v472
        %536 = vmatpush1.bf16.msra.mxu0 %v471
        %537 = vmatprep.subr.bf16.mxu0 %v474
        %538 = vmatpush1.bf16.msra.mxu0 %v473
        %539 = vmatprep.subr.bf16.mxu0 %v476
        %540 = vmatpush1.bf16.msra.mxu0 %v475
        %541 = vmatprep.subr.bf16.mxu0 %v478
        %542 = vmatpush1.bf16.msra.mxu0 %v477
        %543 = vmatprep.mubr.bf16.mxu0 %v348
        %544 = vmatmul.mubr.bf16.gmra.mrb[0].mxu0 %v347
        %v545 = vpop.f32.mrb[0].mxu0
        %v546 = vadd.f32 0.0, %v545
        %v547 = vpop.f32.mrb[0].mxu0
        %v548 = vadd.f32 0.0, %v547
        %v549 = vpop.f32.mrb[0].mxu0
        %v550 = vpop.f32.mrb[0].mxu0
        %551 = vdwg.mxu0
        %v552 = vmul.f32 %v546, 0.0625
        %v553 = vmul.f32 %v548, 0.0625
        %v554 = vld [vmem:[%s271] sm:$0x3]
        %v556 = vlaneseq
        %v557 = vshrl.u32 %v556, 7
        %v558 = vsub.s32 0, %v557
        %v559 = vrot.slane %v554, %v558
        %v560 = vlaneseq
        %v561 = vshrl.u32 %v560, 7
        %v562 = vsub.s32 1, %v561
        %v563 = vrot.slane %v554, %v562
        %v566 = vadd.f32 %v552, %v559
        %v567 = vadd.f32 %v553, %v563
        %568 = vst [vmem:[%s303] sm:$0xff] %v566
        %569 = vst [vmem:[%s303 + $0x8] sm:$0xff] %v567
        %s570 = scalar_lea.vmem %s253, 8 [#allocation2]
        %v571 = vld [vmem:[%s570] sm:$0xff]
        %s572 = scalar_lea.vmem %s262, 256 [#allocation5]
        %v573 = vld [vmem:[%s572] sm:$0xff]
        %v574 = vld [vmem:[%s572 + $0x8] sm:$0xff]
        %v575 = vld [vmem:[%s572 + $0x10] sm:$0xff]
        %v576 = vld [vmem:[%s572 + $0x18] sm:$0xff]
        %v577 = vld [vmem:[%s572 + $0x20] sm:$0xff]
        %v578 = vld [vmem:[%s572 + $0x28] sm:$0xff]
        %v579 = vld [vmem:[%s572 + $0x30] sm:$0xff]
        %v580 = vld [vmem:[%s572 + $0x38] sm:$0xff]
        %v581 = vld [vmem:[%s572 + $0x40] sm:$0xff]
        %v582 = vld [vmem:[%s572 + $0x48] sm:$0xff]
        %v583 = vld [vmem:[%s572 + $0x50] sm:$0xff]
        %v584 = vld [vmem:[%s572 + $0x58] sm:$0xff]
        %v585 = vld [vmem:[%s572 + $0x60] sm:$0xff]
        %v586 = vld [vmem:[%s572 + $0x68] sm:$0xff]
        %v587 = vld [vmem:[%s572 + $0x70] sm:$0xff]
        %v588 = vld [vmem:[%s572 + $0x78] sm:$0xff]
        %v589 = vld [vmem:[%s572 + $0x80] sm:$0xff]
        %v590 = vld [vmem:[%s572 + $0x88] sm:$0xff]
        %v591 = vld [vmem:[%s572 + $0x90] sm:$0xff]
        %v592 = vld [vmem:[%s572 + $0x98] sm:$0xff]
        %v593 = vld [vmem:[%s572 + $0xa0] sm:$0xff]
        %v594 = vld [vmem:[%s572 + $0xa8] sm:$0xff]
        %v595 = vld [vmem:[%s572 + $0xb0] sm:$0xff]
        %v596 = vld [vmem:[%s572 + $0xb8] sm:$0xff]
        %v597 = vld [vmem:[%s572 + $0xc0] sm:$0xff]
        %v598 = vld [vmem:[%s572 + $0xc8] sm:$0xff]
        %v599 = vld [vmem:[%s572 + $0xd0] sm:$0xff]
        %v600 = vld [vmem:[%s572 + $0xd8] sm:$0xff]
        %v601 = vld [vmem:[%s572 + $0xe0] sm:$0xff]
        %v602 = vld [vmem:[%s572 + $0xe8] sm:$0xff]
        %v603 = vld [vmem:[%s572 + $0xf0] sm:$0xff]
        %v604 = vld [vmem:[%s572 + $0xf8] sm:$0xff]
        %v606 = vunpack.c.l.b16 %v571
        %v607 = vunpack.c.h.b16 %v571
        %v608 = vpack.c.b16 %v606, %v606
        %v609 = vpack.c.b16 %v607, %v607
        %v644 = vunpack.c.l.b16 %v573
        %v645 = vunpack.c.h.b16 %v573
        %v646 = vunpack.c.l.b16 %v574
        %v647 = vunpack.c.h.b16 %v574
        %v648 = vunpack.c.l.b16 %v575
        %v649 = vunpack.c.h.b16 %v575
        %v650 = vunpack.c.l.b16 %v576
        %v651 = vunpack.c.h.b16 %v576
        %v652 = vunpack.c.l.b16 %v577
        %v653 = vunpack.c.h.b16 %v577
        %v654 = vunpack.c.l.b16 %v578
        %v655 = vunpack.c.h.b16 %v578
        %v656 = vunpack.c.l.b16 %v579
        %v657 = vunpack.c.h.b16 %v579
        %v658 = vunpack.c.l.b16 %v580
        %v659 = vunpack.c.h.b16 %v580
        %v660 = vunpack.c.l.b16 %v581
        %v661 = vunpack.c.h.b16 %v581
        %v662 = vunpack.c.l.b16 %v582
        %v663 = vunpack.c.h.b16 %v582
        %v664 = vunpack.c.l.b16 %v583
        %v665 = vunpack.c.h.b16 %v583
        %v666 = vunpack.c.l.b16 %v584
        %v667 = vunpack.c.h.b16 %v584
        %v668 = vunpack.c.l.b16 %v585
        %v669 = vunpack.c.h.b16 %v585
        %v670 = vunpack.c.l.b16 %v586
        %v671 = vunpack.c.h.b16 %v586
        %v672 = vunpack.c.l.b16 %v587
        %v673 = vunpack.c.h.b16 %v587
        %v674 = vunpack.c.l.b16 %v588
        %v675 = vunpack.c.h.b16 %v588
        %v676 = vunpack.c.l.b16 %v589
        %v677 = vunpack.c.h.b16 %v589
        %v678 = vunpack.c.l.b16 %v590
        %v679 = vunpack.c.h.b16 %v590
        %v680 = vunpack.c.l.b16 %v591
        %v681 = vunpack.c.h.b16 %v591
        %v682 = vunpack.c.l.b16 %v592
        %v683 = vunpack.c.h.b16 %v592
        %v684 = vunpack.c.l.b16 %v593
        %v685 = vunpack.c.h.b16 %v593
        %v686 = vunpack.c.l.b16 %v594
        %v687 = vunpack.c.h.b16 %v594
        %v688 = vunpack.c.l.b16 %v595
        %v689 = vunpack.c.h.b16 %v595
        %v690 = vunpack.c.l.b16 %v596
        %v691 = vunpack.c.h.b16 %v596
        %v692 = vunpack.c.l.b16 %v597
        %v693 = vunpack.c.h.b16 %v597
        %v694 = vunpack.c.l.b16 %v598
        %v695 = vunpack.c.h.b16 %v598
        %v696 = vunpack.c.l.b16 %v599
        %v697 = vunpack.c.h.b16 %v599
        %v698 = vunpack.c.l.b16 %v600
        %v699 = vunpack.c.h.b16 %v600
        %v700 = vunpack.c.l.b16 %v601
        %v701 = vunpack.c.h.b16 %v601
        %v702 = vunpack.c.l.b16 %v602
        %v703 = vunpack.c.h.b16 %v602
        %v704 = vunpack.c.l.b16 %v603
        %v705 = vunpack.c.h.b16 %v603
        %v706 = vunpack.c.l.b16 %v604
        %v707 = vunpack.c.h.b16 %v604
        %v708 = vpack.c.b16 %v646, %v644
        %v709 = vpack.c.b16 %v647, %v645
        %v710 = vpack.c.b16 %v650, %v648
        %v711 = vpack.c.b16 %v651, %v649
        %v712 = vpack.c.b16 %v654, %v652
        %v713 = vpack.c.b16 %v655, %v653
        %v714 = vpack.c.b16 %v658, %v656
        %v715 = vpack.c.b16 %v659, %v657
        %v716 = vpack.c.b16 %v662, %v660
        %v717 = vpack.c.b16 %v663, %v661
        %v718 = vpack.c.b16 %v666, %v664
        %v719 = vpack.c.b16 %v667, %v665
        %v720 = vpack.c.b16 %v670, %v668
        %v721 = vpack.c.b16 %v671, %v669
        %v722 = vpack.c.b16 %v674, %v672
        %v723 = vpack.c.b16 %v675, %v673
        %v724 = vpack.c.b16 %v678, %v676
        %v725 = vpack.c.b16 %v679, %v677
        %v726 = vpack.c.b16 %v682, %v680
        %v727 = vpack.c.b16 %v683, %v681
        %v728 = vpack.c.b16 %v686, %v684
        %v729 = vpack.c.b16 %v687, %v685
        %v730 = vpack.c.b16 %v690, %v688
        %v731 = vpack.c.b16 %v691, %v689
        %v732 = vpack.c.b16 %v694, %v692
        %v733 = vpack.c.b16 %v695, %v693
        %v734 = vpack.c.b16 %v698, %v696
        %v735 = vpack.c.b16 %v699, %v697
        %v736 = vpack.c.b16 %v702, %v700
        %v737 = vpack.c.b16 %v703, %v701
        %v738 = vpack.c.b16 %v706, %v704
        %v739 = vpack.c.b16 %v707, %v705
        %772 = vmatprep.subr.bf16.mxu0 %v709
        %773 = vmatpush1.bf16.msra.mxu0 %v708
        %774 = vmatprep.subr.bf16.mxu0 %v711
        %775 = vmatpush1.bf16.msra.mxu0 %v710
        %776 = vmatprep.subr.bf16.mxu0 %v713
        %777 = vmatpush1.bf16.msra.mxu0 %v712
        %778 = vmatprep.subr.bf16.mxu0 %v715
        %779 = vmatpush1.bf16.msra.mxu0 %v714
        %780 = vmatprep.subr.bf16.mxu0 %v717
        %781 = vmatpush1.bf16.msra.mxu0 %v716
        %782 = vmatprep.subr.bf16.mxu0 %v719
        %783 = vmatpush1.bf16.msra.mxu0 %v718
        %784 = vmatprep.subr.bf16.mxu0 %v721
        %785 = vmatpush1.bf16.msra.mxu0 %v720
        %786 = vmatprep.subr.bf16.mxu0 %v723
        %787 = vmatpush1.bf16.msra.mxu0 %v722
        %788 = vmatprep.subr.bf16.mxu0 %v725
        %789 = vmatpush1.bf16.msra.mxu0 %v724
        %790 = vmatprep.subr.bf16.mxu0 %v727
        %791 = vmatpush1.bf16.msra.mxu0 %v726
        %792 = vmatprep.subr.bf16.mxu0 %v729
        %793 = vmatpush1.bf16.msra.mxu0 %v728
        %794 = vmatprep.subr.bf16.mxu0 %v731
        %795 = vmatpush1.bf16.msra.mxu0 %v730
        %796 = vmatprep.subr.bf16.mxu0 %v733
        %797 = vmatpush1.bf16.msra.mxu0 %v732
        %798 = vmatprep.subr.bf16.mxu0 %v735
        %799 = vmatpush1.bf16.msra.mxu0 %v734
        %800 = vmatprep.subr.bf16.mxu0 %v737
        %801 = vmatpush1.bf16.msra.mxu0 %v736
        %802 = vmatprep.subr.bf16.mxu0 %v739
        %803 = vmatpush1.bf16.msra.mxu0 %v738
        %804 = vmatprep.mubr.bf16.mxu0 %v609
        %805 = vmatmul.mubr.bf16.gmra.mrb[0].mxu0 %v608
        %v806 = vpop.f32.mrb[0].mxu0
        %v807 = vadd.f32 0.0, %v806
        %v808 = vpop.f32.mrb[0].mxu0
        %v809 = vadd.f32 0.0, %v808
        %v810 = vpop.f32.mrb[0].mxu0
        %v811 = vpop.f32.mrb[0].mxu0
        %812 = vdwg.mxu0
        %v813 = vmul.f32 %v807, 0.0625
        %v814 = vmul.f32 %v809, 0.0625
        %s815 = scalar_lea.vmem %s271, 2 [#allocation7]
        %v816 = vld [vmem:[%s815] sm:$0x3]
        %v818 = vlaneseq
        %v819 = vshrl.u32 %v818, 7
        %v820 = vsub.s32 0, %v819
        %v821 = vrot.slane %v816, %v820
        %v822 = vlaneseq
        %v823 = vshrl.u32 %v822, 7
        %v824 = vsub.s32 1, %v823
        %v825 = vrot.slane %v816, %v824
        %v828 = vadd.f32 %v813, %v821
        %v829 = vadd.f32 %v814, %v825
        %s830 = scalar_lea.vmem %s303, 16 [#allocation8]
        %831 = vst [vmem:[%s830] sm:$0xff] %v828
        %832 = vst [vmem:[%s830 + $0x8] sm:$0xff] %v829
        %s833 = sand.u32 %s138, 1
        %s834 = scalar_lea.sflag [#allocation4], %s833
        %s835 = sand.u32 %s138, 1
        %s836 = smul.addr %s835, 32
        %s837 = scalar_lea.vmem [#allocation8], %s836
        // Predicated region
        $region45: #{tpu_custom_call.1} parent=31 // pred_check
          %p838 = pneg %p148
        $region46: #{tpu_custom_call.1} parent=31 // pred_check_branch
          %840 = sbr.rel (%p838) target = $region48
        $region47: #{tpu_custom_call.1} parent=31 // pred_region
          %s841 = smul.u32 2, %s28
          %s842 = smul.u32 2, %s29
          %s844 = ssub.s32 512, 512
          %845 = vsyncadd %s834, %s844
          %s846 = smul.addr %s30, 2
          %s847 = sadd.s32 %s842, %s846
          %s848 = smul.addr %s841, 2
          %s849 = sadd.s32 %s847, %s848
          %s850 = smul.addr %s849, 128
          %s851 = scalar_lea.hbm %s3, %s850
          %s852 = sshll.u32 %s837, 4
          %s853 = int_to_ptr.vmem [resolvable:$true] %s852
          %858 = dma.vmem_to_hbm [thread:$0]  %s853, 512, %s851, %s834, 256, 256, 16
        $region48: #{tpu_custom_call.1} parent=31 // pred_fallthru
          _
      $region32: #{tpu_custom_call.1} parent=5 // pred_fallthru
        _
      %p859 = scmp.le.s32.totalorder 2, %s18
      // Predicated region
      $region49: #{tpu_custom_call.1} parent=5 // pred_check
        %p860 = pneg %p859
      $region50: #{tpu_custom_call.1} parent=5 // pred_check_branch
        %862 = sbr.rel (%p860) target = $region52
      $region51: #{tpu_custom_call.1} parent=5 // pred_region
        %s863 = ssub.s32 %s18, 2
        // Predicated region
        $region53: #{tpu_custom_call.1} parent=51 // pred_check
          %p864 = pneg %p154
        $region54: #{tpu_custom_call.1} parent=51 // pred_check_branch
          %866 = sbr.rel (%p864) target = $region56
        $region55: #{tpu_custom_call.1} parent=51 // pred_region
          %s867 = sand.u32 %s139, 1
          %s868 = scalar_lea.sflag [#allocation4], %s867
          %s869 = sand.u32 %s139, 1
          %s870 = smul.addr %s869, 32
          %s871 = scalar_lea.vmem [#allocation8], %s870
          %872 = dma.done %s868, 512
        $region56: #{tpu_custom_call.1} parent=51 // pred_fallthru
          _
      $region52: #{tpu_custom_call.1} parent=5 // pred_fallthru
        _
    $region6: #{tpu_custom_call.1} parent=1 // loop_footer
      %s22 = sadd.s32 1, %s18
    $region7: #{tpu_custom_call.1} parent=1 // loop_footer_branch
      %17 = sbr.rel target = $region3
    $region8: #{tpu_custom_call.1} parent=1 // loop_exit
      _
    %873 = vsyncpa [#allocation3], 1
    %s874 = scalar_lea.sflag [#allocation3], 1
    %875 = vsyncpa %s874, 1
    %876 = vsyncpa [#allocation6], 1
    %s877 = scalar_lea.sflag [#allocation6], 1
    %878 = vsyncpa %s877, 1
    %879 = vsyncpa [#allocation4], 1
    %s880 = scalar_lea.sflag [#allocation4], 1
    %881 = vsyncpa %s880, 1

</llo_original>
